<compile_context>
chip_gen: v5e
topology: v5e:2x2
jax: 0.10.0
libtpu: 0.0.40
codegen_flags: <defaults>
</compile_context>

<pallas_src>
import functools
import math

import jax
import jax.numpy as jnp
from jax import lax
from jax.experimental import pallas as pl
from jax.experimental.pallas import tpu as pltpu


# --------------------------------------------------------------------------
# Kernel body: one (batch b, chunk c) grid step.
# --------------------------------------------------------------------------
def _ttt_kernel(momentum, fast_lr, d_model, mxu_dtype,
                x_ref, wqkv_ref, bqkv_ref, w_slow_ref,
                out_ref,
                w_fw, v_fw):
    """Refs:
      x_ref      (1, C, D)  input chunk
      wqkv_ref   (D, 3D)    fused [Wq.T | Wk.T | Wv.T]   (mxu_dtype, resident)
      bqkv_ref   (1, 3D)    fused [bq | bk | bv]         (f32, resident)
      w_slow_ref (3, D, H)  slow weights [W1.T, W2, W3.T](f32, resident)
      out_ref    (1, C, D)  output chunk
      w_fw       (3, D, H)  fast-weight state (f32 scratch, carried over chunks)
      v_fw       (3, D, H)  momentum state    (f32 scratch, carried over chunks)
    """
    f32 = jnp.float32
    D = d_model
    chunk_idx = pl.program_id(1)

    @pl.when(chunk_idx == 0)
    def _():
        # New sequence: re-init fast weights from the VMEM-resident slow
        # weights (VMEM->VMEM copy, no HBM traffic or pipeline stall) and
        # clear momentum.  The slow weights were DMA'd into VMEM once per
        # core by the pipeline (constant index_map) and stay resident.
        w_fw[...] = w_slow_ref[...]
        v_fw[...] = jnp.zeros_like(v_fw)

    mx = lambda t: t.astype(mxu_dtype)   # MXU-operand cast (no-op when f32)

    def nn_dot(a, b):    # a @ b
        return lax.dot_general(a, b, (((1,), (0,)), ((), ())),
                               preferred_element_type=f32)

    def nt_dot(a, b):    # a @ b.T
        return lax.dot_general(a, b, (((1,), (1,)), ((), ())),
                               preferred_element_type=f32)

    def tn_dot(a, b):    # a.T @ b   (chunk axis contracted)
        return lax.dot_general(a, b, (((0,), (0,)), ((), ())),
                               preferred_element_type=f32)

    # ---- fused QKV projection: one MXU matmul instead of three ----
    x = mx(x_ref[0])                                     # (C, D)
    qkv = nn_dot(x, wqkv_ref[...]) + bqkv_ref[...]       # (C, 3D) f32
    Q = mx(qkv[:, 0 * D:1 * D])
    K = mx(qkv[:, 1 * D:2 * D])
    V = qkv[:, 2 * D:3 * D]                              # f32

    # Fast weights stored transposed so no weight `.T` is ever needed.
    W1t = w_fw[0]                                        # (D, H) == W1.T
    W2 = w_fw[1]                                         # (D, H)
    W3t = w_fw[2]                                        # (D, H) == W3.T

    # ---- "update" step on this chunk (keys / values) ----
    A = nn_dot(K, mx(W1t))                               # (C, H)
    Bm = nn_dot(K, mx(W3t))                              # (C, H)
    sigA = jax.nn.sigmoid(A)
    S = sigA * A                                         # silu(A)
    U = S * Bm

    neg_V = mx(-V)                                       # grad_O = -V
    grad_W2 = tn_dot(neg_V, mx(U))                       # (D, H)
    grad_U = nn_dot(neg_V, mx(W2))                       # (C, H)
    grad_S = grad_U * Bm
    grad_B = grad_U * S
    grad_A = grad_S * (sigA * (1.0 + A * (1.0 - sigA)))
    grad_W1t = tn_dot(K, mx(grad_A))                     # (D, H) == grad_W1.T
    grad_W3t = tn_dot(K, mx(grad_B))                     # (D, H) == grad_W3.T

    v1 = momentum * v_fw[0] + grad_W1t
    v2 = momentum * v_fw[1] + grad_W2
    v3 = momentum * v_fw[2] + grad_W3t
    v_fw[0] = v1
    v_fw[1] = v2
    v_fw[2] = v3

    W1t_n = W1t - fast_lr * v1
    W2_n = W2 - fast_lr * v2
    W3t_n = W3t - fast_lr * v3
    w_fw[0] = W1t_n
    w_fw[1] = W2_n
    w_fw[2] = W3t_n
    # TODO(synk): on v5e (1 vst slot, no bf16 VALU) keep a bf16 shadow of the
    #             updated fast weights here and reuse it for the apply and the
    #             next chunk's update matmuls to cut f32 writeback/cast traffic.

    # ---- "apply" the updated fast weights to this chunk's queries ----
    A_q = nn_dot(Q, mx(W1t_n))                           # (C, H)
    B_q = nn_dot(Q, mx(W3t_n))                           # (C, H)
    U_q = jax.nn.sigmoid(A_q) * A_q * B_q
    O_q = nt_dot(mx(U_q), mx(W2_n))                      # (C, D)
    out_ref[0] = O_q.astype(out_ref.dtype)


# --------------------------------------------------------------------------
# Host-side helpers.
# --------------------------------------------------------------------------
def _vmem_capacity_bytes():
    """Per-core VMEM capacity; falls back to the smallest (v7x) budget."""
    try:
        return int(pltpu.get_tpu_info().vmem_capacity_bytes)
    except Exception:  # hardware-query fallback only (e.g. interpret mode)
        return 64 * 1024 * 1024


def _const_spec(block_shape, index_map):
    """BlockSpec for a constant-index operand: single-buffered, since its
    block index never changes and double-buffering would only waste VMEM."""
    try:
        return pl.BlockSpec(block_shape, index_map,
                            pipeline_mode=pl.Buffered(1))
    except (TypeError, AttributeError):
        # Older BlockSpec without pipeline_mode: keep default buffering.
        return pl.BlockSpec(block_shape, index_map)


def _derived_vmem_limit(chunk_size, D, H, x_itemsize, mxu_itemsize):
    """Scoped-VMEM limit derived from the actual buffers (not hard-coded),
    clamped against the chip's capacity (128 MiB v5e/v6e, 64 MiB v7x)."""
    state = 2 * 3 * D * H * 4                      # fast-weight + momentum scratch (f32)
    io = 2 * 2 * chunk_size * D * x_itemsize       # double-buffered x / out tiles
    consts = (3 * D * D * mxu_itemsize             # fused W_qkv (single-buffered)
              + 3 * D * 4                          # fused biases
              + 3 * D * H * 4)                     # resident slow weights
    need = state + io + consts
    cap = _vmem_capacity_bytes()
    if need > cap:
        # TODO(synk): v7x path — tile the H axis of the fast-weight state
        #             (accumulate O_q over H tiles) or store momentum in bf16.
        raise ValueError(
            f"FastWeightTTT VMEM need ({need} B) exceeds capacity ({cap} B); "
            "tile H or reduce chunk_size / hidden size.")
    return min(cap, int(need * 1.25) + (4 << 20))  # headroom for padding/relayout


def prepare_fused_params(params, mxu_dtype=jnp.bfloat16):
    """One-time parameter preparation (hoisted out of the per-call path)."""
    D = params["Wq"].shape[1]
    w_qkv = jnp.concatenate(
        [params["Wq"].T, params["Wk"].T, params["Wv"].T], axis=1
    ).astype(mxu_dtype)                                              # (D, 3D)
    b_qkv = jnp.concatenate(
        [params["bq"].reshape(1, D), params["bk"].reshape(1, D),
         params["bv"].reshape(1, D)], axis=1).astype(jnp.float32)    # (1, 3D)
    w_slow = jnp.stack(
        [params["W1"].T, params["W2"], params["W3"].T], axis=0
    ).astype(jnp.float32)                                            # (3, D, H)
    return w_qkv, b_qkv, w_slow


@functools.partial(
    jax.jit, static_argnames=("chunk_size", "fast_lr", "momentum", "mxu_dtype"))
def fast_weight_ttt(x, w_qkv, b_qkv, w_slow, *, chunk_size,
                    fast_lr=1.0, momentum=0.9, mxu_dtype=jnp.bfloat16):
    """x: (B, T, D) -> (B, T, D).  pad_mask not supported (TODO above)."""
    B, T, D = x.shape
    H = w_slow.shape[2]
    assert T % chunk_size == 0, "T must be a multiple of chunk_size"
    n_chunks = T // chunk_size
    # Perf notes (see header): production chunk_size >= 256, D/H % 128 == 0
    # (lane-dense output stores + aligned Q/K/V slices), B >= 2 on v7x so the
    # parallel batch axis feeds both TensorCores.

    x_isz = jnp.dtype(x.dtype).itemsize
    vmem_limit = _derived_vmem_limit(
        chunk_size, D, H, x_isz, jnp.dtype(w_qkv.dtype).itemsize)

    cost = pl.CostEstimate(
        flops=int(B * T * (6 * D * D + 18 * D * H)),
        transcendentals=int(2 * B * T * H),
        bytes_accessed=int(2 * B * T * D * x_isz
                           + w_qkv.size * jnp.dtype(w_qkv.dtype).itemsize
                           + b_qkv.size * 4 + w_slow.size * 4),
    )

    kernel = functools.partial(_ttt_kernel, float(momentum), float(fast_lr),
                               D, mxu_dtype)
    const2 = lambda b, c: (0, 0)
    const3 = lambda b, c: (0, 0, 0)
    grid_spec = pltpu.PrefetchScalarGridSpec(
        num_scalar_prefetch=0,
        grid=(B, n_chunks),
        in_specs=[
            pl.BlockSpec((1, chunk_size, D), lambda b, c: (b, c, 0)),   # x
            _const_spec((D, 3 * D), const2),                            # W_qkv
            _const_spec((1, 3 * D), const2),                            # b_qkv
            _const_spec((3, D, H), const3),                             # slow W
        ],
        out_specs=pl.BlockSpec((1, chunk_size, D), lambda b, c: (b, c, 0)),
        scratch_shapes=[
            pltpu.VMEM((3, D, H), jnp.float32),   # fast weights [W1.T, W2, W3.T]
            pltpu.VMEM((3, D, H), jnp.float32),   # momentum buffers
        ],
    )
    return pl.pallas_call(
        kernel,
        out_shape=jax.ShapeDtypeStruct((B, T, D), x.dtype),
        grid_spec=grid_spec,
        compiler_params=pltpu.CompilerParams(
            dimension_semantics=("parallel", "arbitrary"),
            vmem_limit_bytes=vmem_limit),
        cost_estimate=cost,
    )(x, w_qkv, b_qkv, w_slow)


# --------------------------------------------------------------------------
# Pure-JAX reference (port of the PyTorch forward, pad_mask=None).
# --------------------------------------------------------------------------
def reference_forward(x, params, chunk_size, fast_lr, momentum):
    B, T, D = x.shape
    Q = jnp.einsum("btd,ed->bte", x, params["Wq"]) + params["bq"][0]
    K = jnp.einsum("btd,ed->bte", x, params["Wk"]) + params["bk"][0]
    V = jnp.einsum("btd,ed->bte", x, params["Wv"]) + params["bv"][0]
    out = jnp.zeros_like(Q)
    for b in range(B):
        W1, W2, W3 = params["W1"], params["W2"], params["W3"]
        v1 = jnp.zeros_like(W1)
        v2 = jnp.zeros_like(W2)
        v3 = jnp.zeros_like(W3)
        for start in range(0, T, chunk_size):
            end = min(T, start + chunk_size)
            Kc, Vc, Qc = K[b, start:end], V[b, start:end], Q[b, start:end]
            A = Kc @ W1.T
            Bm = Kc @ W3.T
            sigA = jax.nn.sigmoid(A)
            S = sigA * A
            U = S * Bm
            grad_O = -Vc
            grad_W2 = grad_O.T @ U
            grad_U = grad_O @ W2
            grad_S = grad_U * Bm
            grad_B = grad_U * S
            grad_A = grad_S * (sigA * (1.0 + A * (1.0 - sigA)))
            grad_W1 = grad_A.T @ Kc
            grad_W3 = grad_B.T @ Kc
            v1 = momentum * v1 + grad_W1
            v2 = momentum * v2 + grad_W2
            v3 = momentum * v3 + grad_W3
            W1 = W1 - fast_lr * v1
            W2 = W2 - fast_lr * v2
            W3 = W3 - fast_lr * v3
            A_q = Qc @ W1.T
            B_q = Qc @ W3.T
            S_q = jax.nn.sigmoid(A_q) * A_q
            O_q = (S_q * B_q) @ W2.T
            out = out.at[b, start:end].set(O_q)
    return out


if __name__ == "__main__":
    B, T, D = 2, 16, 32
    hidden_factor = 2
    H = hidden_factor * D
    chunk_size = 8          # tiny correctness config; production default is 512
    fast_lr, momentum = 0.5, 0.9

    ks = jax.random.split(jax.random.PRNGKey(0), 9)
    params = {
        "W1": jax.random.normal(ks[0], (H, D), jnp.float32) / math.sqrt(D),
        "W2": jax.random.normal(ks[1], (D, H), jnp.float32) / math.sqrt(H),
        "W3": jax.random.normal(ks[2], (H, D), jnp.float32) / math.sqrt(D),
        "Wq": jax.random.normal(ks[3], (D, D), jnp.float32) / math.sqrt(D),
        "bq": jax.random.normal(ks[4], (1, D), jnp.float32) * 0.1,
        "Wk": jax.random.normal(ks[5], (D, D), jnp.float32) / math.sqrt(D),
        "bk": jax.random.normal(ks[6], (1, D), jnp.float32) * 0.1,
        "Wv": jax.random.normal(ks[7], (D, D), jnp.float32) / math.sqrt(D),
        "bv": jnp.zeros((1, D), jnp.float32),
    }
    x = jax.random.normal(ks[8], (B, T, D), jnp.float32)

    ref = reference_forward(x, params, chunk_size, fast_lr, momentum)
    scale = float(jnp.max(jnp.abs(ref))) + 1e-6

    # Exact-precision path (f32 MXU operands): must track the f32 reference.
    fused_f32 = prepare_fused_params(params, jnp.float32)
    out_f32 = jax.block_until_ready(
        fast_weight_ttt(x, *fused_f32, chunk_size=chunk_size,
                        fast_lr=fast_lr, momentum=momentum,
                        mxu_dtype=jnp.float32))
    err32 = float(jnp.max(jnp.abs(out_f32 - ref)))
    assert err32 / scale < 5e-3, f"f32 mismatch: {err32} vs scale {scale}"

    # Performance path (bf16 MXU operands, f32 accumulation / f32 state):
    # loose sanity check only — bf16 rounding compounds across the recurrent
    # fast-weight updates, so exact agreement is not expected.
    fused_bf16 = prepare_fused_params(params, jnp.bfloat16)
    out_bf16 = jax.block_until_ready(
        fast_weight_ttt(x, *fused_bf16, chunk_size=chunk_size,
                        fast_lr=fast_lr, momentum=momentum,
                        mxu_dtype=jnp.bfloat16))
    errbf = float(jnp.max(jnp.abs(out_bf16 - ref)))
    assert math.isfinite(errbf) and errbf / scale < 0.2, (
        f"bf16 mismatch: {errbf} vs scale {scale}")

    print("KERNEL_OK")
</pallas_src>

<mosaic_0001>
module attributes {stable_mosaic.version = 11 : i64} {
  func.func @_ttt_kernel(%arg0: i32, %arg1: i32, %arg2: memref<1x8x32xf32, #tpu.memory_space<vmem>>, %arg3: memref<32x96xf32, #tpu.memory_space<vmem>>, %arg4: memref<1x96xf32, #tpu.memory_space<vmem>>, %arg5: memref<3x32x64xf32, #tpu.memory_space<vmem>>, %arg6: memref<1x8x32xf32, #tpu.memory_space<vmem>>, %arg7: memref<3x32x64xf32, #tpu.memory_space<vmem>>, %arg8: memref<3x32x64xf32, #tpu.memory_space<vmem>>) attributes {dimension_semantics = [#tpu.dimension_semantics<parallel>, #tpu.dimension_semantics<arbitrary>], iteration_bounds = array<i64: 2, 2>, scalar_prefetch = 0 : i64, scratch_operands = 2 : i64, tpu.core_type = #tpu.core_type<tc>, window_params = [{transform_indices = @transform_0, window_bounds = array<i64: 1, 8, 32>}, {pipeline_mode = #tpu.pipeline_mode<synchronous>, transform_indices = @transform_1, window_bounds = array<i64: 32, 96>}, {pipeline_mode = #tpu.pipeline_mode<synchronous>, transform_indices = @transform_2, window_bounds = array<i64: 1, 96>}, {pipeline_mode = #tpu.pipeline_mode<synchronous>, transform_indices = @transform_3, window_bounds = array<i64: 3, 32, 64>}, {transform_indices = @transform_4, window_bounds = array<i64: 1, 8, 32>}]} {
    %c0_i32 = arith.constant 0 : i32
    %0 = arith.cmpi eq, %arg1, %c0_i32 : i32
    %1 = arith.extui %0 : i1 to i32
    %c0_i32_0 = arith.constant 0 : i32
    %2 = arith.cmpi ne, %1, %c0_i32_0 : i32
    scf.if %2 {
      %c0_64 = arith.constant 0 : index
      %c0_65 = arith.constant 0 : index
      %c0_66 = arith.constant 0 : index
      %98 = vector.load %arg5[%c0_64, %c0_65, %c0_66] : memref<3x32x64xf32, #tpu.memory_space<vmem>>, vector<3x32x64xf32>
      %c0_67 = arith.constant 0 : index
      %c0_68 = arith.constant 0 : index
      %c0_69 = arith.constant 0 : index
      %99 = vector.load %arg7[%c0_67, %c0_68, %c0_69] : memref<3x32x64xf32, #tpu.memory_space<vmem>>, vector<3x32x64xf32>
      tpu.vector_store %arg7[%c0_67, %c0_68, %c0_69], %98 {strides = array<i32>} : memref<3x32x64xf32, #tpu.memory_space<vmem>>, vector<3x32x64xf32>,
      %cst_70 = arith.constant 0.000000e+00 : f32
      %100 = vector.broadcast %cst_70 : f32 to vector<3x32x64xf32>
      %c0_71 = arith.constant 0 : index
      %c0_72 = arith.constant 0 : index
      %c0_73 = arith.constant 0 : index
      %101 = vector.load %arg8[%c0_71, %c0_72, %c0_73] : memref<3x32x64xf32, #tpu.memory_space<vmem>>, vector<3x32x64xf32>
      tpu.vector_store %arg8[%c0_71, %c0_72, %c0_73], %100 {strides = array<i32>} : memref<3x32x64xf32, #tpu.memory_space<vmem>>, vector<3x32x64xf32>,
    } else {
    }
    %c0 = arith.constant 0 : index
    %c0_1 = arith.constant 0 : index
    %c0_2 = arith.constant 0 : index
    %3 = vector.load %arg2[%c0, %c0_1, %c0_2] : memref<1x8x32xf32, #tpu.memory_space<vmem>>, vector<1x8x32xf32>
    %4 = vector.shape_cast %3 : vector<1x8x32xf32> to vector<8x32xf32>
    %c0_3 = arith.constant 0 : index
    %c0_4 = arith.constant 0 : index
    %5 = vector.load %arg3[%c0_3, %c0_4] : memref<32x96xf32, #tpu.memory_space<vmem>>, vector<32x96xf32>
    %cst = arith.constant dense<0.000000e+00> : vector<8x96xf32>
    %6 = tpu.matmul %4, %5, %cst {dimension_numbers = #tpu.dot_dimension_numbers<[1], [0], [0], [1], [0, 0, 1, 1], [], []>} : vector<8x32xf32>, vector<32x96xf32>, vector<8x96xf32> -> vector<8x96xf32>
    %c0_5 = arith.constant 0 : index
    %c0_6 = arith.constant 0 : index
    %7 = vector.load %arg4[%c0_5, %c0_6] : memref<1x96xf32, #tpu.memory_space<vmem>>, vector<1x96xf32>
    %8 = vector.broadcast %7 : vector<1x96xf32> to vector<8x96xf32>
    %9 = arith.addf %6, %8 : vector<8x96xf32>
    %10 = vector.extract_strided_slice %9 {offsets = [0, 0], sizes = [8, 32], strides = [1, 1]} : vector<8x96xf32> to vector<8x32xf32>
    %11 = vector.extract_strided_slice %9 {offsets = [0, 32], sizes = [8, 32], strides = [1, 1]} : vector<8x96xf32> to vector<8x32xf32>
    %12 = vector.extract_strided_slice %9 {offsets = [0, 64], sizes = [8, 32], strides = [1, 1]} : vector<8x96xf32> to vector<8x32xf32>
    %c0_7 = arith.constant 0 : index
    %c0_8 = arith.constant 0 : index
    %c0_9 = arith.constant 0 : index
    %13 = vector.load %arg7[%c0_7, %c0_8, %c0_9] : memref<3x32x64xf32, #tpu.memory_space<vmem>>, vector<1x32x64xf32>
    %14 = vector.shape_cast %13 : vector<1x32x64xf32> to vector<32x64xf32>
    %c1 = arith.constant 1 : index
    %c0_10 = arith.constant 0 : index
    %c0_11 = arith.constant 0 : index
    %15 = vector.load %arg7[%c1, %c0_10, %c0_11] : memref<3x32x64xf32, #tpu.memory_space<vmem>>, vector<1x32x64xf32>
    %16 = vector.shape_cast %15 : vector<1x32x64xf32> to vector<32x64xf32>
    %c2 = arith.constant 2 : index
    %c0_12 = arith.constant 0 : index
    %c0_13 = arith.constant 0 : index
    %17 = vector.load %arg7[%c2, %c0_12, %c0_13] : memref<3x32x64xf32, #tpu.memory_space<vmem>>, vector<1x32x64xf32>
    %18 = vector.shape_cast %17 : vector<1x32x64xf32> to vector<32x64xf32>
    %cst_14 = arith.constant dense<0.000000e+00> : vector<8x64xf32>
    %19 = tpu.matmul %11, %14, %cst_14 {dimension_numbers = #tpu.dot_dimension_numbers<[1], [0], [0], [1], [0, 0, 1, 1], [], []>} : vector<8x32xf32>, vector<32x64xf32>, vector<8x64xf32> -> vector<8x64xf32>
    %cst_15 = arith.constant dense<0.000000e+00> : vector<8x64xf32>
    %20 = tpu.matmul %11, %18, %cst_15 {dimension_numbers = #tpu.dot_dimension_numbers<[1], [0], [0], [1], [0, 0, 1, 1], [], []>} : vector<8x32xf32>, vector<32x64xf32>, vector<8x64xf32> -> vector<8x64xf32>
    %21 = arith.negf %19 : vector<8x64xf32>
    %22 = math.exp %21 : vector<8x64xf32>
    %cst_16 = arith.constant 1.000000e+00 : f32
    %23 = vector.broadcast %cst_16 : f32 to vector<8x64xf32>
    %24 = arith.addf %23, %22 : vector<8x64xf32>
    %25 = arith.divf %23, %24 : vector<8x64xf32>
    %26 = arith.mulf %25, %19 : vector<8x64xf32>
    %27 = arith.mulf %26, %20 : vector<8x64xf32>
    %cst_17 = arith.constant 0.000000e+00 : f32
    %28 = vector.broadcast %cst_17 : f32 to vector<8x32xf32>
    %29 = arith.subf %28, %12 : vector<8x32xf32>
    %cst_18 = arith.constant dense<0.000000e+00> : vector<32x64xf32>
    %30 = tpu.matmul %29, %27, %cst_18 {dimension_numbers = #tpu.dot_dimension_numbers<[0], [0], [1], [1], [0, 1, 1, 1], [], []>} : vector<8x32xf32>, vector<8x64xf32>, vector<32x64xf32> -> vector<32x64xf32>
    %cst_19 = arith.constant dense<0.000000e+00> : vector<8x64xf32>
    %31 = tpu.matmul %29, %16, %cst_19 {dimension_numbers = #tpu.dot_dimension_numbers<[1], [0], [0], [1], [0, 0, 1, 1], [], []>} : vector<8x32xf32>, vector<32x64xf32>, vector<8x64xf32> -> vector<8x64xf32>
    %32 = arith.mulf %31, %20 : vector<8x64xf32>
    %33 = arith.mulf %31, %26 : vector<8x64xf32>
    %cst_20 = arith.constant 1.000000e+00 : f32
    %34 = vector.broadcast %cst_20 : f32 to vector<8x64xf32>
    %35 = arith.subf %34, %25 : vector<8x64xf32>
    %36 = arith.mulf %19, %35 : vector<8x64xf32>
    %cst_21 = arith.constant 1.000000e+00 : f32
    %37 = vector.broadcast %cst_21 : f32 to vector<8x64xf32>
    %38 = arith.addf %37, %36 : vector<8x64xf32>
    %39 = arith.mulf %25, %38 : vector<8x64xf32>
    %40 = arith.mulf %32, %39 : vector<8x64xf32>
    %cst_22 = arith.constant dense<0.000000e+00> : vector<32x64xf32>
    %41 = tpu.matmul %11, %40, %cst_22 {dimension_numbers = #tpu.dot_dimension_numbers<[0], [0], [1], [1], [0, 1, 1, 1], [], []>} : vector<8x32xf32>, vector<8x64xf32>, vector<32x64xf32> -> vector<32x64xf32>
    %cst_23 = arith.constant dense<0.000000e+00> : vector<32x64xf32>
    %42 = tpu.matmul %11, %33, %cst_23 {dimension_numbers = #tpu.dot_dimension_numbers<[0], [0], [1], [1], [0, 1, 1, 1], [], []>} : vector<8x32xf32>, vector<8x64xf32>, vector<32x64xf32> -> vector<32x64xf32>
    %c0_24 = arith.constant 0 : index
    %c0_25 = arith.constant 0 : index
    %c0_26 = arith.constant 0 : index
    %43 = vector.load %arg8[%c0_24, %c0_25, %c0_26] : memref<3x32x64xf32, #tpu.memory_space<vmem>>, vector<1x32x64xf32>
    %44 = vector.shape_cast %43 : vector<1x32x64xf32> to vector<32x64xf32>
    %cst_27 = arith.constant 0.899999976 : f32
    %45 = vector.broadcast %cst_27 : f32 to vector<32x64xf32>
    %46 = arith.mulf %45, %44 : vector<32x64xf32>
    %47 = arith.addf %46, %41 : vector<32x64xf32>
    %c1_28 = arith.constant 1 : index
    %c0_29 = arith.constant 0 : index
    %c0_30 = arith.constant 0 : index
    %48 = vector.load %arg8[%c1_28, %c0_29, %c0_30] : memref<3x32x64xf32, #tpu.memory_space<vmem>>, vector<1x32x64xf32>
    %49 = vector.shape_cast %48 : vector<1x32x64xf32> to vector<32x64xf32>
    %cst_31 = arith.constant 0.899999976 : f32
    %50 = vector.broadcast %cst_31 : f32 to vector<32x64xf32>
    %51 = arith.mulf %50, %49 : vector<32x64xf32>
    %52 = arith.addf %51, %30 : vector<32x64xf32>
    %c2_32 = arith.constant 2 : index
    %c0_33 = arith.constant 0 : index
    %c0_34 = arith.constant 0 : index
    %53 = vector.load %arg8[%c2_32, %c0_33, %c0_34] : memref<3x32x64xf32, #tpu.memory_space<vmem>>, vector<1x32x64xf32>
    %54 = vector.shape_cast %53 : vector<1x32x64xf32> to vector<32x64xf32>
    %cst_35 = arith.constant 0.899999976 : f32
    %55 = vector.broadcast %cst_35 : f32 to vector<32x64xf32>
    %56 = arith.mulf %55, %54 : vector<32x64xf32>
    %57 = arith.addf %56, %42 : vector<32x64xf32>
    %c0_36 = arith.constant 0 : index
    %c0_37 = arith.constant 0 : index
    %c0_38 = arith.constant 0 : index
    %58 = vector.load %arg8[%c0_36, %c0_37, %c0_38] : memref<3x32x64xf32, #tpu.memory_space<vmem>>, vector<1x32x64xf32>
    %59 = vector.shape_cast %58 : vector<1x32x64xf32> to vector<32x64xf32>
    %60 = vector.shape_cast %47 : vector<32x64xf32> to vector<1x32x64xf32>
    tpu.vector_store %arg8[%c0_36, %c0_37, %c0_38], %60 {strides = array<i32>} : memref<3x32x64xf32, #tpu.memory_space<vmem>>, vector<1x32x64xf32>,
    %c1_39 = arith.constant 1 : index
    %c0_40 = arith.constant 0 : index
    %c0_41 = arith.constant 0 : index
    %61 = vector.load %arg8[%c1_39, %c0_40, %c0_41] : memref<3x32x64xf32, #tpu.memory_space<vmem>>, vector<1x32x64xf32>
    %62 = vector.shape_cast %61 : vector<1x32x64xf32> to vector<32x64xf32>
    %63 = vector.shape_cast %52 : vector<32x64xf32> to vector<1x32x64xf32>
    tpu.vector_store %arg8[%c1_39, %c0_40, %c0_41], %63 {strides = array<i32>} : memref<3x32x64xf32, #tpu.memory_space<vmem>>, vector<1x32x64xf32>,
    %c2_42 = arith.constant 2 : index
    %c0_43 = arith.constant 0 : index
    %c0_44 = arith.constant 0 : index
    %64 = vector.load %arg8[%c2_42, %c0_43, %c0_44] : memref<3x32x64xf32, #tpu.memory_space<vmem>>, vector<1x32x64xf32>
    %65 = vector.shape_cast %64 : vector<1x32x64xf32> to vector<32x64xf32>
    %66 = vector.shape_cast %57 : vector<32x64xf32> to vector<1x32x64xf32>
    tpu.vector_store %arg8[%c2_42, %c0_43, %c0_44], %66 {strides = array<i32>} : memref<3x32x64xf32, #tpu.memory_space<vmem>>, vector<1x32x64xf32>,
    %cst_45 = arith.constant 5.000000e-01 : f32
    %67 = vector.broadcast %cst_45 : f32 to vector<32x64xf32>
    %68 = arith.mulf %67, %47 : vector<32x64xf32>
    %69 = arith.subf %14, %68 : vector<32x64xf32>
    %cst_46 = arith.constant 5.000000e-01 : f32
    %70 = vector.broadcast %cst_46 : f32 to vector<32x64xf32>
    %71 = arith.mulf %70, %52 : vector<32x64xf32>
    %72 = arith.subf %16, %71 : vector<32x64xf32>
    %cst_47 = arith.constant 5.000000e-01 : f32
    %73 = vector.broadcast %cst_47 : f32 to vector<32x64xf32>
    %74 = arith.mulf %73, %57 : vector<32x64xf32>
    %75 = arith.subf %18, %74 : vector<32x64xf32>
    %c0_48 = arith.constant 0 : index
    %c0_49 = arith.constant 0 : index
    %c0_50 = arith.constant 0 : index
    %76 = vector.load %arg7[%c0_48, %c0_49, %c0_50] : memref<3x32x64xf32, #tpu.memory_space<vmem>>, vector<1x32x64xf32>
    %77 = vector.shape_cast %76 : vector<1x32x64xf32> to vector<32x64xf32>
    %78 = vector.shape_cast %69 : vector<32x64xf32> to vector<1x32x64xf32>
    tpu.vector_store %arg7[%c0_48, %c0_49, %c0_50], %78 {strides = array<i32>} : memref<3x32x64xf32, #tpu.memory_space<vmem>>, vector<1x32x64xf32>,
    %c1_51 = arith.constant 1 : index
    %c0_52 = arith.constant 0 : index
    %c0_53 = arith.constant 0 : index
    %79 = vector.load %arg7[%c1_51, %c0_52, %c0_53] : memref<3x32x64xf32, #tpu.memory_space<vmem>>, vector<1x32x64xf32>
    %80 = vector.shape_cast %79 : vector<1x32x64xf32> to vector<32x64xf32>
    %81 = vector.shape_cast %72 : vector<32x64xf32> to vector<1x32x64xf32>
    tpu.vector_store %arg7[%c1_51, %c0_52, %c0_53], %81 {strides = array<i32>} : memref<3x32x64xf32, #tpu.memory_space<vmem>>, vector<1x32x64xf32>,
    %c2_54 = arith.constant 2 : index
    %c0_55 = arith.constant 0 : index
    %c0_56 = arith.constant 0 : index
    %82 = vector.load %arg7[%c2_54, %c0_55, %c0_56] : memref<3x32x64xf32, #tpu.memory_space<vmem>>, vector<1x32x64xf32>
    %83 = vector.shape_cast %82 : vector<1x32x64xf32> to vector<32x64xf32>
    %84 = vector.shape_cast %75 : vector<32x64xf32> to vector<1x32x64xf32>
    tpu.vector_store %arg7[%c2_54, %c0_55, %c0_56], %84 {strides = array<i32>} : memref<3x32x64xf32, #tpu.memory_space<vmem>>, vector<1x32x64xf32>,
    %cst_57 = arith.constant dense<0.000000e+00> : vector<8x64xf32>
    %85 = tpu.matmul %10, %69, %cst_57 {dimension_numbers = #tpu.dot_dimension_numbers<[1], [0], [0], [1], [0, 0, 1, 1], [], []>} : vector<8x32xf32>, vector<32x64xf32>, vector<8x64xf32> -> vector<8x64xf32>
    %cst_58 = arith.constant dense<0.000000e+00> : vector<8x64xf32>
    %86 = tpu.matmul %10, %75, %cst_58 {dimension_numbers = #tpu.dot_dimension_numbers<[1], [0], [0], [1], [0, 0, 1, 1], [], []>} : vector<8x32xf32>, vector<32x64xf32>, vector<8x64xf32> -> vector<8x64xf32>
    %87 = arith.negf %85 : vector<8x64xf32>
    %88 = math.exp %87 : vector<8x64xf32>
    %cst_59 = arith.constant 1.000000e+00 : f32
    %89 = vector.broadcast %cst_59 : f32 to vector<8x64xf32>
    %90 = arith.addf %89, %88 : vector<8x64xf32>
    %91 = arith.divf %89, %90 : vector<8x64xf32>
    %92 = arith.mulf %91, %85 : vector<8x64xf32>
    %93 = arith.mulf %92, %86 : vector<8x64xf32>
    %cst_60 = arith.constant dense<0.000000e+00> : vector<8x32xf32>
    %94 = tpu.matmul %93, %72, %cst_60 {dimension_numbers = #tpu.dot_dimension_numbers<[1], [1], [0], [0], [0, 0, 1, 0], [], []>} : vector<8x64xf32>, vector<32x64xf32>, vector<8x32xf32> -> vector<8x32xf32>
    %c0_61 = arith.constant 0 : index
    %c0_62 = arith.constant 0 : index
    %c0_63 = arith.constant 0 : index
    %95 = vector.load %arg6[%c0_61, %c0_62, %c0_63] : memref<1x8x32xf32, #tpu.memory_space<vmem>>, vector<1x8x32xf32>
    %96 = vector.shape_cast %95 : vector<1x8x32xf32> to vector<8x32xf32>
    %97 = vector.shape_cast %94 : vector<8x32xf32> to vector<1x8x32xf32>
    tpu.vector_store %arg6[%c0_61, %c0_62, %c0_63], %97 {strides = array<i32>} : memref<1x8x32xf32, #tpu.memory_space<vmem>>, vector<1x8x32xf32>,
    return
  }
  func.func @transform_0(%arg0: i32, %arg1: i32) -> (i32, i32, i32) {
    %c0_i32 = arith.constant 0 : i32
    %c0_i32_0 = arith.constant 0 : i32
    return %arg0, %arg1, %c0_i32 : i32, i32, i32
  }
  func.func @transform_1(%arg0: i32, %arg1: i32) -> (i32, i32) {
    %c0_i32 = arith.constant 0 : i32
    %c0_i32_0 = arith.constant 0 : i32
    %c0_i32_1 = arith.constant 0 : i32
    return %c0_i32, %c0_i32_0 : i32, i32
  }
  func.func @transform_2(%arg0: i32, %arg1: i32) -> (i32, i32) {
    %c0_i32 = arith.constant 0 : i32
    %c0_i32_0 = arith.constant 0 : i32
    %c0_i32_1 = arith.constant 0 : i32
    return %c0_i32, %c0_i32_0 : i32, i32
  }
  func.func @transform_3(%arg0: i32, %arg1: i32) -> (i32, i32, i32) {
    %c0_i32 = arith.constant 0 : i32
    %c0_i32_0 = arith.constant 0 : i32
    %c0_i32_1 = arith.constant 0 : i32
    %c0_i32_2 = arith.constant 0 : i32
    return %c0_i32, %c0_i32_0, %c0_i32_1 : i32, i32, i32
  }
  func.func @transform_4(%arg0: i32, %arg1: i32) -> (i32, i32, i32) {
    %c0_i32 = arith.constant 0 : i32
    %c0_i32_0 = arith.constant 0 : i32
    return %arg0, %arg1, %c0_i32 : i32, i32, i32
  }
}

</mosaic_0001>

<llo_original>
// kernel: fast_weight_ttt.1
$region0: #{fast_weight_ttt.1}
  #allocation0 [shape = 'u32[]', space=smem, size = 0x4, offset = 0x4, fixed_abs, tag = 'smem constant byte address 0x4 - core index']
  #allocation1 [shape = 'u32[72,128]{1,0:T(1,128)}', space=vmem, size = 0x9000, scoped, tag = 'internal scratch']
  #allocation2 [shape = 'f32[3,32,64]{2,1,0:T(8,128)}', space=vmem, size = 0xc000, scoped, tag = 'scratch operand']
  #allocation3 [shape = 'f32[3,32,64]{2,1,0:T(8,128)}', space=vmem, size = 0xc000, scoped, tag = 'scratch operand']
  %s0 = inlined_call_operand.hbm [shape: f32[2,16,32], index: 0, kind: input, shape index: {}]
  %s1 = inlined_call_operand.hbm [shape: f32[32,96], index: 1, kind: input, shape index: {}]
  %s2 = inlined_call_operand.vmem [shape: f32[1,96], index: 2, kind: input, shape index: {}]
  %s3 = inlined_call_operand.hbm [shape: f32[3,32,64], index: 3, kind: input, shape index: {}]
  %s4 = inlined_call_operand.hbm [shape: f32[2,16,32], index: 4, kind: output, shape index: {}]
  %s5 = sld [smem:[#allocation0]]
  $region65: #{fast_weight_ttt.1} parent=0
    _
  %s7 = ssub.s32 1, %s5
  %s8 = scalar_select 0, %s7, %s5
  $region1: #{fast_weight_ttt.1} parent=0
    #allocation4 [shape = 'u8[8192]{0}', space=vmem, size = 0x2000, scoped, tag = 'input window, operand 0']
    #allocation5 [shape = 's32[2]{0}', space=sflag, size = 0x8, scoped, tag = 'scoped memory for fast_weight_ttt.1']
    #allocation6 [shape = 's32[2]{0}', space=sflag, size = 0x8, scoped, tag = 'scoped memory for fast_weight_ttt.1']
    #allocation7 [shape = 'u8[16384]{0}', space=vmem, size = 0x4000, scoped, tag = 'input window, operand 1, single buffered']
    #allocation8 [shape = 's32[1]{0}', space=sflag, size = 0x4, scoped, tag = 'scoped memory for fast_weight_ttt.1']
    #allocation9 [shape = 'u8[49152]{0}', space=vmem, size = 0xc000, scoped, tag = 'input window, operand 3, single buffered']
    #allocation10 [shape = 'u8[8192]{0}', space=vmem, size = 0x2000, scoped, tag = 'output window, operand 0']
    %9 = vsyncpa [#allocation5], 0
    %s10 = scalar_lea.sflag [#allocation5], 1
    %11 = vsyncpa %s10, 0
    %12 = vsyncpa [#allocation8], 0
    %13 = vsyncpa [#allocation6], 0
    %s14 = scalar_lea.sflag [#allocation6], 1
    %15 = vsyncpa %s14, 0
    loop: start=0, step=1, limit=6
    $region2: #{fast_weight_ttt.1} parent=1 // loop_pre_header
      _
    $region3: #{fast_weight_ttt.1} parent=1 // loop_header
      %s17 = sphi 0, %s21
      %p18 = scmp.ge.s32.totalorder %s17, 6
      %s24 = sphi 0, %s36
      %s25 = sphi 0, %s32
      %s26 = sphi 0, %s24
      %s27 = sphi 0, %s25
      %s28 = sphi 0, %s26
      %s29 = sphi 0, %s27
      %s41 = sphi 0, %s43
      %s44 = sphi 0, %s41
      %s45 = sphi 0, %s44
      %s61 = sphi 0, %s45
      %s65 = sphi 0, %s65
      %s67 = sphi 0, %s65
      %s68 = sphi 0, %s67
      %s82 = sphi 0, %s68
      %s86 = sphi 0, %s86
      %s88 = sphi 0, %s86
      %s89 = sphi 0, %s88
      %s103 = sphi 0, %s89
      %s107 = sphi 0, %s107
      %s109 = sphi 0, %s107
      %s110 = sphi 0, %s109
      %s124 = sphi 0, %s110
      %s132 = sphi 0, %s134
      %s135 = sphi 0, %s132
      %s136 = sphi 0, %s135
      %s152 = sphi 0, %s136
    $region4: #{fast_weight_ttt.1} parent=1 // loop_header_branch
      %20 = sbr.rel (%p18) target = $region8
    $region5: #{fast_weight_ttt.1} parent=1 // loop_body
      %s22 = ssub.s32 %s17, 1
      %s23 = ssub.s32 %s17, 2
      %s30 = sadd.s32 1, %s25
      %p31 = scmp.ge.s32.totalorder %s30, 2
      %s32 = scalar_select %p31, 0, %s30
      %s33 = sadd.s32 1, %s24
      %s34 = scalar_select %p31, %s33, %s24
      %p35 = scmp.ge.s32.totalorder %s34, 2
      %s36 = scalar_select %p35, 0, %s34
      %s37 = ssub.s32 %s24, %s36
      %s38 = ssub.s32 %s25, %s32
      %s39 = sor.u32 %s37, %s38
      %p40 = scmp.eq.s32.totalorder %s39, 0
      %s42 = sadd.s32 %s41, 1
      %s43 = scalar_select %p40, %s41, %s42
      %p46 = pneg %p40
      %p47 = scmp.eq.s32.totalorder %s17, 3
      %p48 = por %p46, %p47
      %p49 = scmp.ne.s32.totalorder %s41, %s44
      %p50 = scmp.eq.s32.totalorder %s17, 0
      %p51 = por %p49, %p50
      %p52 = scmp.ne.s32.totalorder %s41, %s44
      %p53 = scmp.eq.s32.totalorder %s22, 3
      %p54 = por %p52, %p53
      %p55 = scmp.ne.s32.totalorder %s44, %s45
      %p56 = scmp.eq.s32.totalorder %s22, 0
      %p57 = por %p55, %p56
      %p58 = scmp.ne.s32.totalorder %s44, %s45
      %p59 = scmp.eq.s32.totalorder %s23, 3
      %p60 = por %p58, %p59
      %p62 = scmp.ne.s32.totalorder %s45, %s61
      %p63 = scmp.eq.s32.totalorder %s23, 0
      %p64 = por %p62, %p63
      %s66 = sadd.s32 %s65, 1
      %p69 = scmp.eq.s32.totalorder %s17, 3
      %p70 = scmp.ne.s32.totalorder %s65, %s67
      %p71 = scmp.eq.s32.totalorder %s17, 0
      %p72 = por %p70, %p71
      %p73 = scmp.ne.s32.totalorder %s65, %s67
      %p74 = scmp.eq.s32.totalorder %s22, 3
      %p75 = por %p73, %p74
      %p76 = scmp.ne.s32.totalorder %s67, %s68
      %p77 = scmp.eq.s32.totalorder %s22, 0
      %p78 = por %p76, %p77
      %p79 = scmp.ne.s32.totalorder %s67, %s68
      %p80 = scmp.eq.s32.totalorder %s23, 3
      %p81 = por %p79, %p80
      %p83 = scmp.ne.s32.totalorder %s68, %s82
      %p84 = scmp.eq.s32.totalorder %s23, 0
      %p85 = por %p83, %p84
      %s87 = sadd.s32 %s86, 1
      %p90 = scmp.eq.s32.totalorder %s17, 3
      %p91 = scmp.ne.s32.totalorder %s86, %s88
      %p92 = scmp.eq.s32.totalorder %s17, 0
      %p93 = por %p91, %p92
      %p94 = scmp.ne.s32.totalorder %s86, %s88
      %p95 = scmp.eq.s32.totalorder %s22, 3
      %p96 = por %p94, %p95
      %p97 = scmp.ne.s32.totalorder %s88, %s89
      %p98 = scmp.eq.s32.totalorder %s22, 0
      %p99 = por %p97, %p98
      %p100 = scmp.ne.s32.totalorder %s88, %s89
      %p101 = scmp.eq.s32.totalorder %s23, 3
      %p102 = por %p100, %p101
      %p104 = scmp.ne.s32.totalorder %s89, %s103
      %p105 = scmp.eq.s32.totalorder %s23, 0
      %p106 = por %p104, %p105
      %s108 = sadd.s32 %s107, 1
      %p111 = scmp.eq.s32.totalorder %s17, 3
      %p112 = scmp.ne.s32.totalorder %s107, %s109
      %p113 = scmp.eq.s32.totalorder %s17, 0
      %p114 = por %p112, %p113
      %p115 = scmp.ne.s32.totalorder %s107, %s109
      %p116 = scmp.eq.s32.totalorder %s22, 3
      %p117 = por %p115, %p116
      %p118 = scmp.ne.s32.totalorder %s109, %s110
      %p119 = scmp.eq.s32.totalorder %s22, 0
      %p120 = por %p118, %p119
      %p121 = scmp.ne.s32.totalorder %s109, %s110
      %p122 = scmp.eq.s32.totalorder %s23, 3
      %p123 = por %p121, %p122
      %p125 = scmp.ne.s32.totalorder %s110, %s124
      %p126 = scmp.eq.s32.totalorder %s23, 0
      %p127 = por %p125, %p126
      %s128 = ssub.s32 %s24, %s36
      %s129 = ssub.s32 %s25, %s32
      %s130 = sor.u32 %s128, %s129
      %p131 = scmp.eq.s32.totalorder %s130, 0
      %s133 = sadd.s32 %s132, 1
      %s134 = scalar_select %p131, %s132, %s133
      %p137 = pneg %p131
      %p138 = scmp.eq.s32.totalorder %s17, 3
      %p139 = por %p137, %p138
      %p140 = scmp.ne.s32.totalorder %s132, %s135
      %p141 = scmp.eq.s32.totalorder %s17, 0
      %p142 = por %p140, %p141
      %p143 = scmp.ne.s32.totalorder %s132, %s135
      %p144 = scmp.eq.s32.totalorder %s22, 3
      %p145 = por %p143, %p144
      %p146 = scmp.ne.s32.totalorder %s135, %s136
      %p147 = scmp.eq.s32.totalorder %s22, 0
      %p148 = por %p146, %p147
      %p149 = scmp.ne.s32.totalorder %s135, %s136
      %p150 = scmp.eq.s32.totalorder %s23, 3
      %p151 = por %p149, %p150
      %p153 = scmp.ne.s32.totalorder %s136, %s152
      %p154 = scmp.eq.s32.totalorder %s23, 0
      %p155 = por %p153, %p154
      %p156 = scmp.le.s32.totalorder 1, %s17
      %p157 = scmp.lt.s32.totalorder %s17, 5
      %p158 = pnand %p156, %p157
      %p159 = pneg %p158
      // Predicated region
      $region9: #{fast_weight_ttt.1} parent=5 // pred_check
        _
      $region10: #{fast_weight_ttt.1} parent=5 // pred_check_branch
        %161 = sbr.rel (%p158) target = $region12
      $region11: #{fast_weight_ttt.1} parent=5 // pred_region
        %s162 = ssub.s32 %s17, 1
        // Predicated region
        $region13: #{fast_weight_ttt.1} parent=11 // pred_check
          %p163 = pneg %p78
        $region14: #{fast_weight_ttt.1} parent=11 // pred_check_branch
          %165 = sbr.rel (%p163) target = $region16
        $region15: #{fast_weight_ttt.1} parent=11 // pred_region
          %167 = vsyncadd [#allocation8], 0
          %s168 = sshll.u32 %s1, 4
          %s169 = int_to_ptr.hbm [resolvable:$true] %s168
          %s170 = sshll.u32 [#allocation7], 4
          %s171 = int_to_ptr.vmem [resolvable:$true] %s170
          %176 = dma.hbm_to_vmem [thread:$0]  %s169, 512, %s171, [#allocation8], 128, 128, 8
        $region16: #{fast_weight_ttt.1} parent=11 // pred_fallthru
          _
        // Predicated region
        $region17: #{fast_weight_ttt.1} parent=11 // pred_check
          %p177 = pneg %p99
        $region18: #{fast_weight_ttt.1} parent=11 // pred_check_branch
          %179 = sbr.rel (%p177) target = $region20
        $region19: #{fast_weight_ttt.1} parent=11 // pred_region
          _
        $region20: #{fast_weight_ttt.1} parent=11 // pred_fallthru
          _
        // Predicated region
        $region21: #{fast_weight_ttt.1} parent=11 // pred_check
          %p180 = pneg %p120
        $region22: #{fast_weight_ttt.1} parent=11 // pred_check_branch
          %182 = sbr.rel (%p180) target = $region24
        $region23: #{fast_weight_ttt.1} parent=11 // pred_region
          %184 = vsyncadd [#allocation8], 0
          %s185 = sshll.u32 %s3, 4
          %s186 = int_to_ptr.hbm [resolvable:$true] %s185
          %s187 = sshll.u32 [#allocation9], 4
          %s188 = int_to_ptr.vmem [resolvable:$true] %s187
          %193 = dma.hbm_to_vmem [thread:$0]  %s186, 1536, %s188, [#allocation8], 128, 128, 8
        $region24: #{fast_weight_ttt.1} parent=11 // pred_fallthru
          _
      $region12: #{fast_weight_ttt.1} parent=5 // pred_fallthru
        _
      %p194 = scmp.lt.s32.totalorder %s17, 4
      // Predicated region
      $region25: #{fast_weight_ttt.1} parent=5 // pred_check
        %p195 = pneg %p194
      $region26: #{fast_weight_ttt.1} parent=5 // pred_check_branch
        %197 = sbr.rel (%p195) target = $region28
      $region27: #{fast_weight_ttt.1} parent=5 // pred_region
        // Predicated region
        $region29: #{fast_weight_ttt.1} parent=27 // pred_check
          %p198 = pneg %p51
        $region30: #{fast_weight_ttt.1} parent=27 // pred_check_branch
          %200 = sbr.rel (%p198) target = $region32
        $region31: #{fast_weight_ttt.1} parent=27 // pred_region
          %s201 = sand.u32 %s41, 1
          %s202 = scalar_lea.sflag [#allocation5], %s201
          %s203 = sand.u32 %s41, 1
          %s204 = smul.addr %s203, 8
          %s205 = scalar_lea.vmem [#allocation4], %s204
          %207 = vsyncadd %s202, 0
          %s208 = smul.addr %s24, 2
          %s209 = sadd.s32 %s25, %s208
          %s210 = smul.addr %s209, 8
          %s211 = scalar_lea.hbm %s0, %s210
          %s213 = sshll.u32 %s211, 4
          %s214 = int_to_ptr.hbm [resolvable:$true] %s213
          %s215 = sshll.u32 %s205, 4
          %s216 = int_to_ptr.vmem [resolvable:$true] %s215
          %218 = dma.hbm_to_vmem [thread:$0]  %s214, 128, %s216, %s202
        $region32: #{fast_weight_ttt.1} parent=27 // pred_fallthru
          _
      $region28: #{fast_weight_ttt.1} parent=5 // pred_fallthru
        _
      %p219 = scmp.le.s32.totalorder 1, %s17
      %p220 = scmp.lt.s32.totalorder %s17, 5
      %p221 = pnand %p219, %p220
      %p222 = pneg %p221
      // Predicated region
      $region33: #{fast_weight_ttt.1} parent=5 // pred_check
        _
      $region34: #{fast_weight_ttt.1} parent=5 // pred_check_branch
        %224 = sbr.rel (%p221) target = $region36
      $region35: #{fast_weight_ttt.1} parent=5 // pred_region
        %s225 = ssub.s32 %s17, 1
        %s226 = sand.u32 %s44, 1
        %s227 = scalar_lea.sflag [#allocation5], %s226
        %s228 = sand.u32 %s44, 1
        %s229 = smul.addr %s228, 8
        %s230 = scalar_lea.vmem [#allocation4], %s229
        // Predicated region
        $region37: #{fast_weight_ttt.1} parent=35 // pred_check
          %p231 = pneg %p57
        $region38: #{fast_weight_ttt.1} parent=35 // pred_check_branch
          %233 = sbr.rel (%p231) target = $region40
        $region39: #{fast_weight_ttt.1} parent=35 // pred_region
          %235 = dma.done %s227, 128
        $region40: #{fast_weight_ttt.1} parent=35 // pred_fallthru
          _
        // Predicated region
        $region41: #{fast_weight_ttt.1} parent=35 // pred_check
          %p236 = pneg %p78
        $region42: #{fast_weight_ttt.1} parent=35 // pred_check_branch
          %238 = sbr.rel (%p236) target = $region44
        $region43: #{fast_weight_ttt.1} parent=35 // pred_region
          %240 = dma.done [#allocation8], 512
        $region44: #{fast_weight_ttt.1} parent=35 // pred_fallthru
          _
        // Predicated region
        $region45: #{fast_weight_ttt.1} parent=35 // pred_check
          %p241 = pneg %p120
        $region46: #{fast_weight_ttt.1} parent=35 // pred_check_branch
          %243 = sbr.rel (%p241) target = $region48
        $region47: #{fast_weight_ttt.1} parent=35 // pred_region
          %245 = dma.done [#allocation8], 1536
        $region48: #{fast_weight_ttt.1} parent=35 // pred_fallthru
          _
        %s246 = sand.u32 %s44, 1
        %s247 = scalar_lea.sflag [#allocation5], %s246
        %s248 = sand.u32 %s44, 1
        %s249 = smul.addr %s248, 8
        %s250 = scalar_lea.vmem [#allocation4], %s249
        %p251 = pneg %p57
        %p252 = pneg %p54
        %p253 = pneg %p78
        %p254 = pneg %p75
        %p255 = pneg %p99
        %p256 = pneg %p96
        %p257 = pneg %p120
        %p258 = pneg %p117
        %p259 = pneg %p148
        %p260 = pneg %p145
        %s261 = sand.u32 %s135, 1
        %s262 = scalar_lea.sflag [#allocation6], %s261
        %s263 = sand.u32 %s135, 1
        %s264 = smul.addr %s263, 8
        %s265 = scalar_lea.vmem [#allocation10], %s264
        %p266 = scmp.eq.s32.totalorder %s27, 0
        // Predicated region
        $region49: #{fast_weight_ttt.1} parent=35 // pred_check
          %p267 = pneg %p266
        $region50: #{fast_weight_ttt.1} parent=35 // pred_check_branch
          %269 = sbr.rel (%p267) target = $region52
        $region51: #{fast_weight_ttt.1} parent=35 // pred_region
          %v270 = vld [vmem:[#allocation9] sm:$0xff]
          %v271 = vld [vmem:[#allocation9 + $0x8] sm:$0xff]
          %v272 = vld [vmem:[#allocation9 + $0x10] sm:$0xff]
          %v273 = vld [vmem:[#allocation9 + $0x18] sm:$0xff]
          %v274 = vld [vmem:[#allocation9 + $0x20] sm:$0xff]
          %v275 = vld [vmem:[#allocation9 + $0x28] sm:$0xff]
          %v276 = vld [vmem:[#allocation9 + $0x30] sm:$0xff]
          %v277 = vld [vmem:[#allocation9 + $0x38] sm:$0xff]
          %v278 = vld [vmem:[#allocation9 + $0x40] sm:$0xff]
          %v279 = vld [vmem:[#allocation9 + $0x48] sm:$0xff]
          %v280 = vld [vmem:[#allocation9 + $0x50] sm:$0xff]
          %v281 = vld [vmem:[#allocation9 + $0x58] sm:$0xff]
          %vm282 = vcmask 523264
          %283 = vst.msk [vmem:[#allocation2] sm:$0xff] %vm282, %v270
          %284 = vst.msk [vmem:[#allocation2 + $0x8] sm:$0xff] %vm282, %v271
          %285 = vst.msk [vmem:[#allocation2 + $0x10] sm:$0xff] %vm282, %v272
          %286 = vst.msk [vmem:[#allocation2 + $0x18] sm:$0xff] %vm282, %v273
          %287 = vst.msk [vmem:[#allocation2 + $0x20] sm:$0xff] %vm282, %v274
          %288 = vst.msk [vmem:[#allocation2 + $0x28] sm:$0xff] %vm282, %v275
          %289 = vst.msk [vmem:[#allocation2 + $0x30] sm:$0xff] %vm282, %v276
          %290 = vst.msk [vmem:[#allocation2 + $0x38] sm:$0xff] %vm282, %v277
          %291 = vst.msk [vmem:[#allocation2 + $0x40] sm:$0xff] %vm282, %v278
          %292 = vst.msk [vmem:[#allocation2 + $0x48] sm:$0xff] %vm282, %v279
          %293 = vst.msk [vmem:[#allocation2 + $0x50] sm:$0xff] %vm282, %v280
          %294 = vst.msk [vmem:[#allocation2 + $0x58] sm:$0xff] %vm282, %v281
          %295 = vst.msk [vmem:[#allocation3] sm:$0xff] %vm282, 0.0
          %296 = vst.msk [vmem:[#allocation3 + $0x8] sm:$0xff] %vm282, 0.0
          %297 = vst.msk [vmem:[#allocation3 + $0x10] sm:$0xff] %vm282, 0.0
          %298 = vst.msk [vmem:[#allocation3 + $0x18] sm:$0xff] %vm282, 0.0
          %299 = vst.msk [vmem:[#allocation3 + $0x20] sm:$0xff] %vm282, 0.0
          %300 = vst.msk [vmem:[#allocation3 + $0x28] sm:$0xff] %vm282, 0.0
          %301 = vst.msk [vmem:[#allocation3 + $0x30] sm:$0xff] %vm282, 0.0
          %302 = vst.msk [vmem:[#allocation3 + $0x38] sm:$0xff] %vm282, 0.0
          %303 = vst.msk [vmem:[#allocation3 + $0x40] sm:$0xff] %vm282, 0.0
          %304 = vst.msk [vmem:[#allocation3 + $0x48] sm:$0xff] %vm282, 0.0
          %305 = vst.msk [vmem:[#allocation3 + $0x50] sm:$0xff] %vm282, 0.0
          %306 = vst.msk [vmem:[#allocation3 + $0x58] sm:$0xff] %vm282, 0.0
        $region52: #{fast_weight_ttt.1} parent=35 // pred_fallthru
          _
        %v307 = vld [vmem:[%s230] sm:$0xff]
        %v308 = vld [vmem:[#allocation7] sm:$0xff]
        %v309 = vld [vmem:[#allocation7 + $0x8] sm:$0xff]
        %v310 = vld [vmem:[#allocation7 + $0x10] sm:$0xff]
        %v311 = vld [vmem:[#allocation7 + $0x18] sm:$0xff]
        %v312 = vld [vmem:[%s2] sm:$0x1]
        %v314 = vperm.slane %v312, 0
        %vm316 = vcmask 261120
        %v318 = vsel %vm316, %v307, 0
        %320 = vmatpush.msra.mxu0 0.0
        %321 = vmatpush.msra.mxu0 0.0
        %322 = vmatpush.msra.mxu0 0.0
        %323 = vmatpush.msra.mxu0 0.0
        %324 = vmatpush.msra.mxu0 0.0
        %325 = vmatpush.msra.mxu0 0.0
        %326 = vmatpush.msra.mxu0 0.0
        %327 = vmatpush.msra.mxu0 0.0
        %328 = vmatpush.msra.mxu0 0.0
        %329 = vmatpush.msra.mxu0 0.0
        %330 = vmatpush.msra.mxu0 0.0
        %331 = vmatpush.msra.mxu0 0.0
        %332 = vmatpush.msra.mxu0 %v311
        %333 = vmatpush.msra.mxu0 %v310
        %334 = vmatpush.msra.mxu0 %v309
        %335 = vmatpush.msra.mxu0 %v308
        %336 = vmatmul.f32.gmra.mxu0 %v318
        %v337 = vpop.f32.mrf.mxu0
        %v338 = vadd.f32 %v314, %v337
        %339 = vdwg.mxu0
        %v340 = vld [vmem:[#allocation2] sm:$0xff]
        %v341 = vld [vmem:[#allocation2 + $0x8] sm:$0xff]
        %v342 = vld [vmem:[#allocation2 + $0x10] sm:$0xff]
        %v343 = vld [vmem:[#allocation2 + $0x18] sm:$0xff]
        %s344 = scalar_lea.vmem [#allocation2], 32
        %v345 = vld [vmem:[%s344] sm:$0xff]
        %v346 = vld [vmem:[%s344 + $0x8] sm:$0xff]
        %v347 = vld [vmem:[%s344 + $0x10] sm:$0xff]
        %v348 = vld [vmem:[%s344 + $0x18] sm:$0xff]
        %s349 = scalar_lea.vmem [#allocation2], 64
        %v350 = vld [vmem:[%s349] sm:$0xff]
        %v351 = vld [vmem:[%s349 + $0x8] sm:$0xff]
        %v352 = vld [vmem:[%s349 + $0x10] sm:$0xff]
        %v353 = vld [vmem:[%s349 + $0x18] sm:$0xff]
        %355 = vrot.lane.b32.xlu0 %v338, 96
        %v356 = vpop.permute.xlu0 %355
        %v357 = vsel %vm316, %v356, 0
        %359 = vmatpush.msra.mxu0 0.0
        %360 = vmatpush.msra.mxu0 0.0
        %361 = vmatpush.msra.mxu0 0.0
        %362 = vmatpush.msra.mxu0 0.0
        %363 = vmatpush.msra.mxu0 0.0
        %364 = vmatpush.msra.mxu0 0.0
        %365 = vmatpush.msra.mxu0 0.0
        %366 = vmatpush.msra.mxu0 0.0
        %367 = vmatpush.msra.mxu0 0.0
        %368 = vmatpush.msra.mxu0 0.0
        %369 = vmatpush.msra.mxu0 0.0
        %370 = vmatpush.msra.mxu0 0.0
        %371 = vmatpush.msra.mxu0 %v343
        %372 = vmatpush.msra.mxu0 %v342
        %373 = vmatpush.msra.mxu0 %v341
        %374 = vmatpush.msra.mxu0 %v340
        %375 = vmatmul.f32.gmra.mxu0 %v357
        %v376 = vpop.f32.mrf.mxu0
        %v377 = vadd.f32 0.0, %v376
        %378 = vdwg.mxu0
        %379 = vmatpush.msra.mxu0 0.0
        %380 = vmatpush.msra.mxu0 0.0
        %381 = vmatpush.msra.mxu0 0.0
        %382 = vmatpush.msra.mxu0 0.0
        %383 = vmatpush.msra.mxu0 0.0
        %384 = vmatpush.msra.mxu0 0.0
        %385 = vmatpush.msra.mxu0 0.0
        %386 = vmatpush.msra.mxu0 0.0
        %387 = vmatpush.msra.mxu0 0.0
        %388 = vmatpush.msra.mxu0 0.0
        %389 = vmatpush.msra.mxu0 0.0
        %390 = vmatpush.msra.mxu0 0.0
        %391 = vmatpush.msra.mxu0 %v353
        %392 = vmatpush.msra.mxu0 %v352
        %393 = vmatpush.msra.mxu0 %v351
        %394 = vmatpush.msra.mxu0 %v350
        %395 = vmatmul.f32.gmra.mxu0 %v357
        %v396 = vpop.f32.mrf.mxu0
        %v397 = vadd.f32 0.0, %v396
        %398 = vdwg.mxu0
        %v399 = vxor.u32 %v377, 2147483648
        %v400 = vmul.f32 %v399, 1.442695
        %v401 = vpow.pop %v400
        %v402 = vadd.f32 %v401, 1.0
        %v403 = vrcp.pop %v402
        %v404 = vmul.f32 %v402, %v403
        %v405 = vsub.f32 1.0, %v404
        %v406 = vmul.f32 %v403, %v405
        %v407 = vadd.f32 %v403, %v406
        %vm408 = vweird.f32 %v402
        %vm409 = vweird.f32 %v403
        %vm410 = vmor %vm408, %vm409
        %v411 = vsel %vm410, %v403, %v407
        %v412 = vand.u32 2147483647, %v402
        %vm413 = vcmp.eq.f32.partialorder %v412, 8.507059e+37
        %v414 = vand.u32 %v402, 2147483648
        %v415 = vor.u32 1.1754944e-38, %v414
        %v416 = vsel %vm413, %v415, %v411
        %v417 = vmul.f32 1.0, %v416
        %v418 = vmul.f32 %v417, %v377
        %v419 = vmul.f32 %v418, %v397
        %v420 = vsub.f32 0.0, %v338
        %422 = vrot.lane.b32.xlu0 %v420, 64
        %v423 = vpop.permute.xlu0 %422
        %425 = vxpose.xlu0.b32.start [1/16] %v423, 128
        %426 = vxpose.xlu0.b32.cont [2/16] 0.0, 128
        %427 = vxpose.xlu0.b32.cont [3/16] 0.0, 128
        %428 = vxpose.xlu0.b32.cont [4/16] 0.0, 128
        %429 = vxpose.xlu0.b32.cont [5/16] 0.0, 128
        %430 = vxpose.xlu0.b32.cont [6/16] 0.0, 128
        %431 = vxpose.xlu0.b32.cont [7/16] 0.0, 128
        %432 = vxpose.xlu0.b32.cont [8/16] 0.0, 128
        %433 = vxpose.xlu0.b32.cont [9/16] 0.0, 128
        %434 = vxpose.xlu0.b32.cont [10/16] 0.0, 128
        %435 = vxpose.xlu0.b32.cont [11/16] 0.0, 128
        %436 = vxpose.xlu0.b32.cont [12/16] 0.0, 128
        %437 = vxpose.xlu0.b32.cont [13/16] 0.0, 128
        %438 = vxpose.xlu0.b32.cont [14/16] 0.0, 128
        %439 = vxpose.xlu0.b32.cont [15/16] 0.0, 128
        %440 = vxpose.xlu0.b32.end [16/16] 0.0, 128
        %v441 = vpop.trf.xlu0
        %v442 = vpop.trf.xlu0
        %v443 = vpop.trf.xlu0
        %v444 = vpop.trf.xlu0
        %v445 = vpop.trf.xlu0
        %v446 = vpop.trf.xlu0
        %v447 = vpop.trf.xlu0
        %v448 = vpop.trf.xlu0
        %v449 = vpop.trf.xlu0
        %v450 = vpop.trf.xlu0
        %v451 = vpop.trf.xlu0
        %v452 = vpop.trf.xlu0
        %v453 = vpop.trf.xlu0
        %v454 = vpop.trf.xlu0
        %v455 = vpop.trf.xlu0
        %v456 = vpop.trf.xlu0
        %vm457 = vcmask 64512
        %v459 = vsel %vm457, %v441, 0
        %v462 = vsel %vm457, %v442, 0
        %v465 = vsel %vm457, %v443, 0
        %v468 = vsel %vm457, %v444, 0
        %470 = vmatpush.msra.mxu0 0.0
        %471 = vmatpush.msra.mxu0 0.0
        %472 = vmatpush.msra.mxu0 0.0
        %473 = vmatpush.msra.mxu0 0.0
        %474 = vmatpush.msra.mxu0 0.0
        %475 = vmatpush.msra.mxu0 0.0
        %476 = vmatpush.msra.mxu0 0.0
        %477 = vmatpush.msra.mxu0 0.0
        %478 = vmatpush.msra.mxu0 0.0
        %479 = vmatpush.msra.mxu0 0.0
        %480 = vmatpush.msra.mxu0 0.0
        %481 = vmatpush.msra.mxu0 0.0
        %482 = vmatpush.msra.mxu0 0.0
        %483 = vmatpush.msra.mxu0 0.0
        %484 = vmatpush.msra.mxu0 0.0
        %485 = vmatpush.msra.mxu0 %v419
        %486 = vmatmul.f32.gmra.mxu0 %v459
        %v487 = vpop.f32.mrf.mxu0
        %v488 = vadd.f32 0.0, %v487
        %489 = vmatmul.f32.gmra.mxu0 %v462
        %v490 = vpop.f32.mrf.mxu0
        %v491 = vadd.f32 0.0, %v490
        %492 = vmatmul.f32.gmra.mxu0 %v465
        %v493 = vpop.f32.mrf.mxu0
        %v494 = vadd.f32 0.0, %v493
        %495 = vmatmul.f32.gmra.mxu0 %v468
        %v496 = vpop.f32.mrf.mxu0
        %v497 = vadd.f32 0.0, %v496
        %498 = vdwg.mxu0
        %v499 = vsel %vm316, %v423, 0
        %501 = vmatpush.msra.mxu0 0.0
        %502 = vmatpush.msra.mxu0 0.0
        %503 = vmatpush.msra.mxu0 0.0
        %504 = vmatpush.msra.mxu0 0.0
        %505 = vmatpush.msra.mxu0 0.0
        %506 = vmatpush.msra.mxu0 0.0
        %507 = vmatpush.msra.mxu0 0.0
        %508 = vmatpush.msra.mxu0 0.0
        %509 = vmatpush.msra.mxu0 0.0
        %510 = vmatpush.msra.mxu0 0.0
        %511 = vmatpush.msra.mxu0 0.0
        %512 = vmatpush.msra.mxu0 0.0
        %513 = vmatpush.msra.mxu0 %v348
        %514 = vmatpush.msra.mxu0 %v347
        %515 = vmatpush.msra.mxu0 %v346
        %516 = vmatpush.msra.mxu0 %v345
        %517 = vmatmul.f32.gmra.mxu0 %v499
        %v518 = vpop.f32.mrf.mxu0
        %v519 = vadd.f32 0.0, %v518
        %520 = vdwg.mxu0
        %v521 = vmul.f32 %v519, %v397
        %v522 = vmul.f32 %v519, %v418
        %v523 = vsub.f32 1.0, %v417
        %v524 = vmul.f32 %v377, %v523
        %v525 = vadd.f32 %v524, 1.0
        %v526 = vmul.f32 %v417, %v525
        %v527 = vmul.f32 %v521, %v526
        %529 = vxpose.xlu0.b32.start [1/16] %v356, 128
        %530 = vxpose.xlu0.b32.cont [2/16] 0.0, 128
        %531 = vxpose.xlu0.b32.cont [3/16] 0.0, 128
        %532 = vxpose.xlu0.b32.cont [4/16] 0.0, 128
        %533 = vxpose.xlu0.b32.cont [5/16] 0.0, 128
        %534 = vxpose.xlu0.b32.cont [6/16] 0.0, 128
        %535 = vxpose.xlu0.b32.cont [7/16] 0.0, 128
        %536 = vxpose.xlu0.b32.cont [8/16] 0.0, 128
        %537 = vxpose.xlu0.b32.cont [9/16] 0.0, 128
        %538 = vxpose.xlu0.b32.cont [10/16] 0.0, 128
        %539 = vxpose.xlu0.b32.cont [11/16] 0.0, 128
        %540 = vxpose.xlu0.b32.cont [12/16] 0.0, 128
        %541 = vxpose.xlu0.b32.cont [13/16] 0.0, 128
        %542 = vxpose.xlu0.b32.cont [14/16] 0.0, 128
        %543 = vxpose.xlu0.b32.cont [15/16] 0.0, 128
        %544 = vxpose.xlu0.b32.end [16/16] 0.0, 128
        %v545 = vpop.trf.xlu0
        %v546 = vpop.trf.xlu0
        %v547 = vpop.trf.xlu0
        %v548 = vpop.trf.xlu0
        %v549 = vpop.trf.xlu0
        %v550 = vpop.trf.xlu0
        %v551 = vpop.trf.xlu0
        %v552 = vpop.trf.xlu0
        %v553 = vpop.trf.xlu0
        %v554 = vpop.trf.xlu0
        %v555 = vpop.trf.xlu0
        %v556 = vpop.trf.xlu0
        %v557 = vpop.trf.xlu0
        %v558 = vpop.trf.xlu0
        %v559 = vpop.trf.xlu0
        %v560 = vpop.trf.xlu0
        %v562 = vsel %vm457, %v545, 0
        %v565 = vsel %vm457, %v546, 0
        %v568 = vsel %vm457, %v547, 0
        %v571 = vsel %vm457, %v548, 0
        %573 = vmatpush.msra.mxu0 0.0
        %574 = vmatpush.msra.mxu0 0.0
        %575 = vmatpush.msra.mxu0 0.0
        %576 = vmatpush.msra.mxu0 0.0
        %577 = vmatpush.msra.mxu0 0.0
        %578 = vmatpush.msra.mxu0 0.0
        %579 = vmatpush.msra.mxu0 0.0
        %580 = vmatpush.msra.mxu0 0.0
        %581 = vmatpush.msra.mxu0 0.0
        %582 = vmatpush.msra.mxu0 0.0
        %583 = vmatpush.msra.mxu0 0.0
        %584 = vmatpush.msra.mxu0 0.0
        %585 = vmatpush.msra.mxu0 0.0
        %586 = vmatpush.msra.mxu0 0.0
        %587 = vmatpush.msra.mxu0 0.0
        %588 = vmatpush.msra.mxu0 %v527
        %589 = vmatmul.f32.gmra.mxu0 %v562
        %v590 = vpop.f32.mrf.mxu0
        %v591 = vadd.f32 0.0, %v590
        %592 = vmatmul.f32.gmra.mxu0 %v565
        %v593 = vpop.f32.mrf.mxu0
        %v594 = vadd.f32 0.0, %v593
        %595 = vmatmul.f32.gmra.mxu0 %v568
        %v596 = vpop.f32.mrf.mxu0
        %v597 = vadd.f32 0.0, %v596
        %598 = vmatmul.f32.gmra.mxu0 %v571
        %v599 = vpop.f32.mrf.mxu0
        %v600 = vadd.f32 0.0, %v599
        %601 = vdwg.mxu0
        %602 = vmatpush.msra.mxu0 0.0
        %603 = vmatpush.msra.mxu0 0.0
        %604 = vmatpush.msra.mxu0 0.0
        %605 = vmatpush.msra.mxu0 0.0
        %606 = vmatpush.msra.mxu0 0.0
        %607 = vmatpush.msra.mxu0 0.0
        %608 = vmatpush.msra.mxu0 0.0
        %609 = vmatpush.msra.mxu0 0.0
        %610 = vmatpush.msra.mxu0 0.0
        %611 = vmatpush.msra.mxu0 0.0
        %612 = vmatpush.msra.mxu0 0.0
        %613 = vmatpush.msra.mxu0 0.0
        %614 = vmatpush.msra.mxu0 0.0
        %615 = vmatpush.msra.mxu0 0.0
        %616 = vmatpush.msra.mxu0 0.0
        %617 = vmatpush.msra.mxu0 %v522
        %618 = vmatmul.f32.gmra.mxu0 %v562
        %v619 = vpop.f32.mrf.mxu0
        %v620 = vadd.f32 0.0, %v619
        %621 = vmatmul.f32.gmra.mxu0 %v565
        %v622 = vpop.f32.mrf.mxu0
        %v623 = vadd.f32 0.0, %v622
        %624 = vmatmul.f32.gmra.mxu0 %v568
        %v625 = vpop.f32.mrf.mxu0
        %v626 = vadd.f32 0.0, %v625
        %627 = vmatmul.f32.gmra.mxu0 %v571
        %v628 = vpop.f32.mrf.mxu0
        %v629 = vadd.f32 0.0, %v628
        %630 = vdwg.mxu0
        %v631 = vld [vmem:[#allocation3] sm:$0xff]
        %v632 = vld [vmem:[#allocation3 + $0x8] sm:$0xff]
        %v633 = vld [vmem:[#allocation3 + $0x10] sm:$0xff]
        %v634 = vld [vmem:[#allocation3 + $0x18] sm:$0xff]
        %v635 = vmul.f32 %v631, 0.9
        %v636 = vmul.f32 %v632, 0.9
        %v637 = vmul.f32 %v633, 0.9
        %v638 = vmul.f32 %v634, 0.9
        %v639 = vadd.f32 %v635, %v591
        %v640 = vadd.f32 %v636, %v594
        %v641 = vadd.f32 %v637, %v597
        %v642 = vadd.f32 %v638, %v600
        %s643 = scalar_lea.vmem [#allocation3], 32
        %v644 = vld [vmem:[%s643] sm:$0xff]
        %v645 = vld [vmem:[%s643 + $0x8] sm:$0xff]
        %v646 = vld [vmem:[%s643 + $0x10] sm:$0xff]
        %v647 = vld [vmem:[%s643 + $0x18] sm:$0xff]
        %v648 = vmul.f32 %v644, 0.9
        %v649 = vmul.f32 %v645, 0.9
        %v650 = vmul.f32 %v646, 0.9
        %v651 = vmul.f32 %v647, 0.9
        %v652 = vadd.f32 %v648, %v488
        %v653 = vadd.f32 %v649, %v491
        %v654 = vadd.f32 %v650, %v494
        %v655 = vadd.f32 %v651, %v497
        %s656 = scalar_lea.vmem [#allocation3], 64
        %v657 = vld [vmem:[%s656] sm:$0xff]
        %v658 = vld [vmem:[%s656 + $0x8] sm:$0xff]
        %v659 = vld [vmem:[%s656 + $0x10] sm:$0xff]
        %v660 = vld [vmem:[%s656 + $0x18] sm:$0xff]
        %v661 = vmul.f32 %v657, 0.9
        %v662 = vmul.f32 %v658, 0.9
        %v663 = vmul.f32 %v659, 0.9
        %v664 = vmul.f32 %v660, 0.9
        %v665 = vadd.f32 %v661, %v620
        %v666 = vadd.f32 %v662, %v623
        %v667 = vadd.f32 %v663, %v626
        %v668 = vadd.f32 %v664, %v629
        %vm669 = vcmask 523264
        %670 = vst.msk [vmem:[#allocation3] sm:$0xff] %vm669, %v639
        %671 = vst.msk [vmem:[#allocation3 + $0x8] sm:$0xff] %vm669, %v640
        %672 = vst.msk [vmem:[#allocation3 + $0x10] sm:$0xff] %vm669, %v641
        %673 = vst.msk [vmem:[#allocation3 + $0x18] sm:$0xff] %vm669, %v642
        %674 = vst.msk [vmem:[%s643] sm:$0xff] %vm669, %v652
        %675 = vst.msk [vmem:[%s643 + $0x8] sm:$0xff] %vm669, %v653
        %676 = vst.msk [vmem:[%s643 + $0x10] sm:$0xff] %vm669, %v654
        %677 = vst.msk [vmem:[%s643 + $0x18] sm:$0xff] %vm669, %v655
        %678 = vst.msk [vmem:[%s656] sm:$0xff] %vm669, %v665
        %679 = vst.msk [vmem:[%s656 + $0x8] sm:$0xff] %vm669, %v666
        %680 = vst.msk [vmem:[%s656 + $0x10] sm:$0xff] %vm669, %v667
        %681 = vst.msk [vmem:[%s656 + $0x18] sm:$0xff] %vm669, %v668
        %v682 = vmul.f32 %v639, 0.5
        %v683 = vmul.f32 %v640, 0.5
        %v684 = vmul.f32 %v641, 0.5
        %v685 = vmul.f32 %v642, 0.5
        %v686 = vsub.f32 %v340, %v682
        %v687 = vsub.f32 %v341, %v683
        %v688 = vsub.f32 %v342, %v684
        %v689 = vsub.f32 %v343, %v685
        %v690 = vmul.f32 %v652, 0.5
        %v691 = vmul.f32 %v653, 0.5
        %v692 = vmul.f32 %v654, 0.5
        %v693 = vmul.f32 %v655, 0.5
        %v694 = vsub.f32 %v345, %v690
        %v695 = vsub.f32 %v346, %v691
        %v696 = vsub.f32 %v347, %v692
        %v697 = vsub.f32 %v348, %v693
        %v698 = vmul.f32 %v665, 0.5
        %v699 = vmul.f32 %v666, 0.5
        %v700 = vmul.f32 %v667, 0.5
        %v701 = vmul.f32 %v668, 0.5
        %v702 = vsub.f32 %v350, %v698
        %v703 = vsub.f32 %v351, %v699
        %v704 = vsub.f32 %v352, %v700
        %v705 = vsub.f32 %v353, %v701
        %706 = vst.msk [vmem:[#allocation2] sm:$0xff] %vm669, %v686
        %707 = vst.msk [vmem:[#allocation2 + $0x8] sm:$0xff] %vm669, %v687
        %708 = vst.msk [vmem:[#allocation2 + $0x10] sm:$0xff] %vm669, %v688
        %709 = vst.msk [vmem:[#allocation2 + $0x18] sm:$0xff] %vm669, %v689
        %710 = vst.msk [vmem:[%s344] sm:$0xff] %vm669, %v694
        %711 = vst.msk [vmem:[%s344 + $0x8] sm:$0xff] %vm669, %v695
        %712 = vst.msk [vmem:[%s344 + $0x10] sm:$0xff] %vm669, %v696
        %713 = vst.msk [vmem:[%s344 + $0x18] sm:$0xff] %vm669, %v697
        %714 = vst.msk [vmem:[%s349] sm:$0xff] %vm669, %v702
        %715 = vst.msk [vmem:[%s349 + $0x8] sm:$0xff] %vm669, %v703
        %716 = vst.msk [vmem:[%s349 + $0x10] sm:$0xff] %vm669, %v704
        %717 = vst.msk [vmem:[%s349 + $0x18] sm:$0xff] %vm669, %v705
        %v718 = vsel %vm316, %v338, 0
        %720 = vmatpush.msra.mxu0 0.0
        %721 = vmatpush.msra.mxu0 0.0
        %722 = vmatpush.msra.mxu0 0.0
        %723 = vmatpush.msra.mxu0 0.0
        %724 = vmatpush.msra.mxu0 0.0
        %725 = vmatpush.msra.mxu0 0.0
        %726 = vmatpush.msra.mxu0 0.0
        %727 = vmatpush.msra.mxu0 0.0
        %728 = vmatpush.msra.mxu0 0.0
        %729 = vmatpush.msra.mxu0 0.0
        %730 = vmatpush.msra.mxu0 0.0
        %731 = vmatpush.msra.mxu0 0.0
        %732 = vmatpush.msra.mxu0 %v689
        %733 = vmatpush.msra.mxu0 %v688
        %734 = vmatpush.msra.mxu0 %v687
        %735 = vmatpush.msra.mxu0 %v686
        %736 = vmatmul.f32.gmra.mxu0 %v718
        %v737 = vpop.f32.mrf.mxu0
        %v738 = vadd.f32 0.0, %v737
        %739 = vdwg.mxu0
        %740 = vmatpush.msra.mxu0 0.0
        %741 = vmatpush.msra.mxu0 0.0
        %742 = vmatpush.msra.mxu0 0.0
        %743 = vmatpush.msra.mxu0 0.0
        %744 = vmatpush.msra.mxu0 0.0
        %745 = vmatpush.msra.mxu0 0.0
        %746 = vmatpush.msra.mxu0 0.0
        %747 = vmatpush.msra.mxu0 0.0
        %748 = vmatpush.msra.mxu0 0.0
        %749 = vmatpush.msra.mxu0 0.0
        %750 = vmatpush.msra.mxu0 0.0
        %751 = vmatpush.msra.mxu0 0.0
        %752 = vmatpush.msra.mxu0 %v705
        %753 = vmatpush.msra.mxu0 %v704
        %754 = vmatpush.msra.mxu0 %v703
        %755 = vmatpush.msra.mxu0 %v702
        %756 = vmatmul.f32.gmra.mxu0 %v718
        %v757 = vpop.f32.mrf.mxu0
        %v758 = vadd.f32 0.0, %v757
        %759 = vdwg.mxu0
        %v760 = vxor.u32 %v738, 2147483648
        %v761 = vmul.f32 %v760, 1.442695
        %v762 = vpow.pop %v761
        %v763 = vadd.f32 %v762, 1.0
        %v764 = vrcp.pop %v763
        %v765 = vmul.f32 %v763, %v764
        %v766 = vsub.f32 1.0, %v765
        %v767 = vmul.f32 %v764, %v766
        %v768 = vadd.f32 %v764, %v767
        %vm769 = vweird.f32 %v763
        %vm770 = vweird.f32 %v764
        %vm771 = vmor %vm769, %vm770
        %v772 = vsel %vm771, %v764, %v768
        %v773 = vand.u32 2147483647, %v763
        %vm774 = vcmp.eq.f32.partialorder %v773, 8.507059e+37
        %v775 = vand.u32 %v763, 2147483648
        %v776 = vor.u32 1.1754944e-38, %v775
        %v777 = vsel %vm774, %v776, %v772
        %v778 = vmul.f32 1.0, %v777
        %v779 = vmul.f32 %v778, %v738
        %v780 = vmul.f32 %v779, %v758
        %v782 = vsel %vm669, %v780, 0
        %v785 = vsel %vm669, %v694, 0
        %v788 = vsel %vm669, %v695, 0
        %v791 = vsel %vm669, %v696, 0
        %v794 = vsel %vm669, %v697, 0
        %796 = vmatpush.xpose.msra.mxu0 0.0
        %797 = vmatpush.xpose.msra.mxu0 0.0
        %798 = vmatpush.xpose.msra.mxu0 0.0
        %799 = vmatpush.xpose.msra.mxu0 0.0
        %800 = vmatpush.xpose.msra.mxu0 0.0
        %801 = vmatpush.xpose.msra.mxu0 0.0
        %802 = vmatpush.xpose.msra.mxu0 0.0
        %803 = vmatpush.xpose.msra.mxu0 0.0
        %804 = vmatpush.xpose.msra.mxu0 0.0
        %805 = vmatpush.xpose.msra.mxu0 0.0
        %806 = vmatpush.xpose.msra.mxu0 0.0
        %807 = vmatpush.xpose.msra.mxu0 0.0
        %808 = vmatpush.xpose.msra.mxu0 %v794
        %809 = vmatpush.xpose.msra.mxu0 %v791
        %810 = vmatpush.xpose.msra.mxu0 %v788
        %811 = vmatpush.xpose.msra.mxu0 %v785
        %812 = vmatmul.f32.gmra.mxu0 %v782
        %v813 = vpop.f32.mrf.mxu0
        %v814 = vadd.f32 0.0, %v813
        %815 = vdwg.mxu0
        %816 = vst.msk [vmem:[%s265] sm:$0xff] %vm316, %v814
        %s817 = sand.u32 %s135, 1
        %s818 = scalar_lea.sflag [#allocation6], %s817
        %s819 = sand.u32 %s135, 1
        %s820 = smul.addr %s819, 8
        %s821 = scalar_lea.vmem [#allocation10], %s820
        // Predicated region
        $region53: #{fast_weight_ttt.1} parent=35 // pred_check
          %p822 = pneg %p145
        $region54: #{fast_weight_ttt.1} parent=35 // pred_check_branch
          %824 = sbr.rel (%p822) target = $region56
        $region55: #{fast_weight_ttt.1} parent=35 // pred_region
          %826 = vsyncadd %s818, 0
          %s827 = smul.addr %s26, 2
          %s828 = sadd.s32 %s27, %s827
          %s829 = smul.addr %s828, 8
          %s830 = scalar_lea.hbm %s4, %s829
          %s832 = sshll.u32 %s821, 4
          %s833 = int_to_ptr.vmem [resolvable:$true] %s832
          %s834 = sshll.u32 %s830, 4
          %s835 = int_to_ptr.hbm [resolvable:$true] %s834
          %837 = dma.vmem_to_hbm [thread:$0]  %s833, 128, %s835, %s818
        $region56: #{fast_weight_ttt.1} parent=35 // pred_fallthru
          _
      $region36: #{fast_weight_ttt.1} parent=5 // pred_fallthru
        _
      %p838 = scmp.le.s32.totalorder 2, %s17
      // Predicated region
      $region57: #{fast_weight_ttt.1} parent=5 // pred_check
        %p839 = pneg %p838
      $region58: #{fast_weight_ttt.1} parent=5 // pred_check_branch
        %841 = sbr.rel (%p839) target = $region60
      $region59: #{fast_weight_ttt.1} parent=5 // pred_region
        %s842 = ssub.s32 %s17, 2
        // Predicated region
        $region61: #{fast_weight_ttt.1} parent=59 // pred_check
          %p843 = pneg %p151
        $region62: #{fast_weight_ttt.1} parent=59 // pred_check_branch
          %845 = sbr.rel (%p843) target = $region64
        $region63: #{fast_weight_ttt.1} parent=59 // pred_region
          %s846 = sand.u32 %s136, 1
          %s847 = scalar_lea.sflag [#allocation6], %s846
          %s848 = sand.u32 %s136, 1
          %s849 = smul.addr %s848, 8
          %s850 = scalar_lea.vmem [#allocation10], %s849
          %852 = dma.done %s847, 128
        $region64: #{fast_weight_ttt.1} parent=59 // pred_fallthru
          _
      $region60: #{fast_weight_ttt.1} parent=5 // pred_fallthru
        _
    $region6: #{fast_weight_ttt.1} parent=1 // loop_footer
      %s21 = sadd.s32 1, %s17
    $region7: #{fast_weight_ttt.1} parent=1 // loop_footer_branch
      %16 = sbr.rel target = $region3
    $region8: #{fast_weight_ttt.1} parent=1 // loop_exit
      _
    %853 = vsyncpa [#allocation5], 1
    %s854 = scalar_lea.sflag [#allocation5], 1
    %855 = vsyncpa %s854, 1
    %856 = vsyncpa [#allocation8], 1
    %857 = vsyncpa [#allocation6], 1
    %s858 = scalar_lea.sflag [#allocation6], 1
    %859 = vsyncpa %s858, 1

</llo_original>
